<compile_context>
chip_gen: v7x
topology: tpu7x:2x2x1
jax: 0.10.0
libtpu: 0.0.40
codegen_flags: <defaults>
</compile_context>

<pallas_src>
import functools

import jax
import jax.numpy as jnp
from jax import lax
from jax.experimental import pallas as pl
from jax.experimental.pallas import tpu as pltpu

VIDEO_MEAN = 0.421
VIDEO_STD = 0.165
LN_EPS = 1e-5


# ---------------------------------------------------------------------------
# Fused kernel: audio LN + video transform + synthetic AV front-end
# ---------------------------------------------------------------------------
def fused_pipeline_kernel(a_ref, v_ref, w_ref, b_ref, wo_ref, o_ref,
                          *, n_valid, n_frames):
    # ---- audio: s16 -> f32/32768, utterance layer-norm (F.layer_norm over the
    #      whole waveform), then cut_or_pad to n_frames*640 ------------------
    a = a_ref[...].astype(jnp.float32) * (1.0 / 32768.0)        # (rows, 640)
    inv_n = 1.0 / n_valid                                        # static scalar
    s = jnp.sum(a)                                               # zero padding
    sq = jnp.sum(a * a)                                          # is sum-neutral
    mu = s * inv_n
    var = sq * inv_n - mu * mu                                   # biased var (== F.layer_norm)
    inv_std = lax.rsqrt(var + LN_EPS)
    audio_frames = (a[:n_frames, :] - mu) * inv_std              # (T, 640)
    if n_valid < n_frames * 640:
        # original zero-pads AFTER normalisation -> mask the padded tail to 0
        idx = (lax.broadcasted_iota(jnp.int32, (n_frames, 640), 0) * 640
               + lax.broadcasted_iota(jnp.int32, (n_frames, 640), 1))
        audio_frames = jnp.where(idx < n_valid, audio_frames, 0.0)

    # ---- video: grayscale (ITU-R) + /255 + (x-mean)/std, constants folded ---
    c = 1.0 / (255.0 * VIDEO_STD)
    r = v_ref[0].astype(jnp.float32)                             # (T, HW)
    g = v_ref[1].astype(jnp.float32)
    b_ch = v_ref[2].astype(jnp.float32)
    vfeat = ((0.299 * c) * r + (0.587 * c) * g + (0.114 * c) * b_ch
             - (VIDEO_MEAN / VIDEO_STD))                         # (T, HW)

    # ---- synthetic front-end: logits = relu([A|V] @ [Wa;Wv] + b) @ Wo -------
    x = jnp.concatenate([audio_frames, vfeat], axis=1).astype(jnp.bfloat16)
    h = jnp.dot(x, w_ref[...], preferred_element_type=jnp.float32) + b_ref[...]
    h = jnp.maximum(h, 0.0).astype(jnp.bfloat16)
    o_ref[...] = jnp.dot(h, wo_ref[...], preferred_element_type=jnp.float32)


# ---------------------------------------------------------------------------
# Wrapper (mirrors InferencePipeline.forward control flow, audiovisual)
# ---------------------------------------------------------------------------
def inference_pipeline(audio_i16, video_u8, wa, wv, b, wo):
    T, H, W, C = video_u8.shape
    HW = H * W
    hidden = wa.shape[1]
    vocab = wo.shape[1]
    hidden_pad = max(128, -(-hidden // 128) * 128)               # lane-dense hidden

    # ---- load_audio glue: channel mean is an identity for mono (C_a == 1) ---
    n_samples = audio_i16.shape[1]
    audio_flat = audio_i16.reshape(-1)                           # raw int samples

    # rate-ratio check (shapes are static -> plain Python, like the original)
    rate_ratio = n_samples // T
    if rate_ratio > 670 or rate_ratio < 530:
        print(f"WARNING: Inconsistent frame ratio. Found audio length: "
              f"{n_samples}, video length: {T}.")

    # zero-pad the raw waveform to whole 640-sample rows; cut_or_pad itself is
    # applied inside the kernel after the layer-norm (matching original order).
    rows = max(T, -(-n_samples // 640))
    audio_pad = jnp.pad(audio_flat, (0, rows * 640 - n_samples)).reshape(rows, 640)

    # ---- video glue: permute (T,H,W,C)->(C,T,H*W) on the narrow dtype -------
    # bf16 is exact for 0..255 and halves the input DMA vs. an f32 cast.
    video_cthw = jnp.transpose(video_u8.astype(jnp.bfloat16),
                               (3, 0, 1, 2)).reshape(C, T, HW)

    # ---- weight prep: [Wa; Wv] concatenated, hidden padded to 128, bf16 -----
    w_cat = jnp.zeros((640 + HW, hidden_pad), jnp.float32)
    w_cat = w_cat.at[:640, :hidden].set(wa).at[640:, :hidden].set(wv)
    w_cat = w_cat.astype(jnp.bfloat16)
    b_pad = jnp.zeros((1, hidden_pad), jnp.float32).at[:, :hidden].set(b)
    wo_pad = jnp.zeros((hidden_pad, vocab), jnp.float32).at[:hidden, :].set(wo)
    wo_pad = wo_pad.astype(jnp.bfloat16)

    kernel = functools.partial(fused_pipeline_kernel,
                               n_valid=n_samples, n_frames=T)
    logits = pl.pallas_call(
        kernel,
        grid=(1,),
        in_specs=[
            pl.BlockSpec((rows, 640), lambda i: (0, 0)),
            pl.BlockSpec((C, T, HW), lambda i: (0, 0, 0)),
            pl.BlockSpec((640 + HW, hidden_pad), lambda i: (0, 0)),
            pl.BlockSpec((1, hidden_pad), lambda i: (0, 0)),
            pl.BlockSpec((hidden_pad, vocab), lambda i: (0, 0)),
        ],
        out_specs=pl.BlockSpec((T, vocab), lambda i: (0, 0)),
        out_shape=jax.ShapeDtypeStruct((T, vocab), jnp.float32),
        compiler_params=pltpu.CompilerParams(
            dimension_semantics=("arbitrary",)),
    )(audio_pad, video_cthw, w_cat, b_pad, wo_pad)

    # TODO(synk): beam-search decoding to a text transcript has no Pallas
    # equivalent; return per-frame token logits instead.
    return logits


# ---------------------------------------------------------------------------
if __name__ == "__main__":
    key = jax.random.PRNGKey(0)
    k_aud, k_vid, k_wa, k_wv, k_b, k_wo = jax.random.split(key, 6)

    # Small synthetic shapes: 8 video frames of 16x16 RGB, ~0.325 s of 16 kHz audio.
    T, H, W, C = 8, 16, 16, 3
    N_RAW = 5200                     # rate_ratio = 650 -> exercises cut_or_pad path
    HIDDEN, VOCAB = 32, 128

    # Synthetic decoded media (stand-ins for ffmpeg / torchvision decode).
    audio_i16 = jax.random.randint(k_aud, (1, N_RAW), -32768, 32768, dtype=jnp.int32)
    video_u8 = jax.random.randint(k_vid, (T, H, W, C), 0, 256,
                                  dtype=jnp.int32).astype(jnp.uint8)

    # Deterministic synthetic model weights.
    wa = jax.random.normal(k_wa, (640, HIDDEN), jnp.float32) * 0.02
    wv = jax.random.normal(k_wv, (H * W, HIDDEN), jnp.float32) * 0.02
    b = jax.random.normal(k_b, (1, HIDDEN), jnp.float32) * 0.02
    wo = jax.random.normal(k_wo, (HIDDEN, VOCAB), jnp.float32) * 0.02

    run = jax.jit(inference_pipeline)
    logits = run(audio_i16, video_u8, wa, wv, b, wo)
    jax.block_until_ready(logits)
    assert logits.shape == (T, VOCAB) and logits.dtype == jnp.float32
    print("KERNEL_OK")
</pallas_src>

<mosaic_0001>
module attributes {stable_mosaic.version = 11 : i64} {
  func.func @fused_pipeline_kernel(%arg0: i32, %arg1: memref<9x640xi32, #tpu.memory_space<vmem>>, %arg2: memref<3x8x256xbf16, #tpu.memory_space<vmem>>, %arg3: memref<896x128xbf16, #tpu.memory_space<vmem>>, %arg4: memref<1x128xf32, #tpu.memory_space<vmem>>, %arg5: memref<128x128xbf16, #tpu.memory_space<vmem>>, %arg6: memref<8x128xf32, #tpu.memory_space<vmem>>) attributes {dimension_semantics = [#tpu.dimension_semantics<arbitrary>], iteration_bounds = array<i64: 1>, scalar_prefetch = 0 : i64, scratch_operands = 0 : i64, tpu.core_type = #tpu.core_type<tc>, window_params = [{pipeline_mode = #tpu.pipeline_mode<synchronous>, transform_indices = @transform_0, window_bounds = array<i64: 9, 640>}, {pipeline_mode = #tpu.pipeline_mode<synchronous>, transform_indices = @transform_1, window_bounds = array<i64: 3, 8, 256>}, {pipeline_mode = #tpu.pipeline_mode<synchronous>, transform_indices = @transform_2, window_bounds = array<i64: 896, 128>}, {pipeline_mode = #tpu.pipeline_mode<synchronous>, transform_indices = @transform_3, window_bounds = array<i64: 1, 128>}, {pipeline_mode = #tpu.pipeline_mode<synchronous>, transform_indices = @transform_4, window_bounds = array<i64: 128, 128>}, {pipeline_mode = #tpu.pipeline_mode<synchronous>, transform_indices = @transform_5, window_bounds = array<i64: 8, 128>}]} {
    %c0 = arith.constant 0 : index
    %c0_0 = arith.constant 0 : index
    %0 = vector.load %arg1[%c0, %c0_0] : memref<9x640xi32, #tpu.memory_space<vmem>>, vector<9x640xi32>
    %1 = arith.sitofp %0 : vector<9x640xi32> to vector<9x640xf32>
    %cst = arith.constant 3.05175781E-5 : f32
    %2 = vector.broadcast %cst : f32 to vector<9x640xf32>
    %3 = arith.mulf %1, %2 : vector<9x640xf32>
    %4 = vector.shape_cast %3 : vector<9x640xf32> to vector<1x9x640xf32>
    %cst_1 = arith.constant dense<0.000000e+00> : vector<1xf32>
    %5 = vector.multi_reduction <add>, %4, %cst_1 [1, 2] : vector<1x9x640xf32> to vector<1xf32>
    %6 = vector.shape_cast %5 : vector<1xf32> to vector<1x1x1xf32>
    %7 = vector.extract %6[0, 0, 0] : f32 from vector<1x1x1xf32>
    %8 = arith.mulf %3, %3 : vector<9x640xf32>
    %9 = vector.shape_cast %8 : vector<9x640xf32> to vector<1x9x640xf32>
    %cst_2 = arith.constant dense<0.000000e+00> : vector<1xf32>
    %10 = vector.multi_reduction <add>, %9, %cst_2 [1, 2] : vector<1x9x640xf32> to vector<1xf32>
    %11 = vector.shape_cast %10 : vector<1xf32> to vector<1x1x1xf32>
    %12 = vector.extract %11[0, 0, 0] : f32 from vector<1x1x1xf32>
    %cst_3 = arith.constant 1.92307692E-4 : f32
    %13 = arith.mulf %7, %cst_3 : f32
    %cst_4 = arith.constant 1.92307692E-4 : f32
    %14 = arith.mulf %12, %cst_4 : f32
    %15 = arith.mulf %13, %13 : f32
    %16 = arith.subf %14, %15 : f32
    %cst_5 = arith.constant 9.99999974E-6 : f32
    %17 = arith.addf %16, %cst_5 : f32
    %18 = math.rsqrt %17 : f32
    %19 = vector.extract_strided_slice %3 {offsets = [0, 0], sizes = [8, 640], strides = [1, 1]} : vector<9x640xf32> to vector<8x640xf32>
    %20 = vector.broadcast %13 : f32 to vector<8x640xf32>
    %21 = arith.subf %19, %20 : vector<8x640xf32>
    %22 = vector.broadcast %18 : f32 to vector<8x640xf32>
    %23 = arith.mulf %21, %22 : vector<8x640xf32>
    %c0_6 = arith.constant 0 : index
    %c0_7 = arith.constant 0 : index
    %c0_8 = arith.constant 0 : index
    %24 = vector.load %arg2[%c0_6, %c0_7, %c0_8] : memref<3x8x256xbf16, #tpu.memory_space<vmem>>, vector<1x8x256xbf16>
    %25 = vector.shape_cast %24 : vector<1x8x256xbf16> to vector<8x256xbf16>
    %26 = arith.extf %25 : vector<8x256xbf16> to vector<8x256xf32>
    %c1 = arith.constant 1 : index
    %c0_9 = arith.constant 0 : index
    %c0_10 = arith.constant 0 : index
    %27 = vector.load %arg2[%c1, %c0_9, %c0_10] : memref<3x8x256xbf16, #tpu.memory_space<vmem>>, vector<1x8x256xbf16>
    %28 = vector.shape_cast %27 : vector<1x8x256xbf16> to vector<8x256xbf16>
    %29 = arith.extf %28 : vector<8x256xbf16> to vector<8x256xf32>
    %c2 = arith.constant 2 : index
    %c0_11 = arith.constant 0 : index
    %c0_12 = arith.constant 0 : index
    %30 = vector.load %arg2[%c2, %c0_11, %c0_12] : memref<3x8x256xbf16, #tpu.memory_space<vmem>>, vector<1x8x256xbf16>
    %31 = vector.shape_cast %30 : vector<1x8x256xbf16> to vector<8x256xbf16>
    %32 = arith.extf %31 : vector<8x256xbf16> to vector<8x256xf32>
    %cst_13 = arith.constant 0.00710635772 : f32
    %33 = vector.broadcast %cst_13 : f32 to vector<8x256xf32>
    %34 = arith.mulf %33, %26 : vector<8x256xf32>
    %cst_14 = arith.constant 0.0139512774 : f32
    %35 = vector.broadcast %cst_14 : f32 to vector<8x256xf32>
    %36 = arith.mulf %35, %29 : vector<8x256xf32>
    %37 = arith.addf %34, %36 : vector<8x256xf32>
    %cst_15 = arith.constant 0.00270944741 : f32
    %38 = vector.broadcast %cst_15 : f32 to vector<8x256xf32>
    %39 = arith.mulf %38, %32 : vector<8x256xf32>
    %40 = arith.addf %37, %39 : vector<8x256xf32>
    %cst_16 = arith.constant 2.5515151 : f32
    %41 = vector.broadcast %cst_16 : f32 to vector<8x256xf32>
    %42 = arith.subf %40, %41 : vector<8x256xf32>
    %43 = tpu.concatenate %23, %42 in 1 : vector<8x640xf32>, vector<8x256xf32> -> vector<8x896xf32>
    %44 = arith.truncf %43 : vector<8x896xf32> to vector<8x896xbf16>
    %c0_17 = arith.constant 0 : index
    %c0_18 = arith.constant 0 : index
    %45 = vector.load %arg3[%c0_17, %c0_18] : memref<896x128xbf16, #tpu.memory_space<vmem>>, vector<896x128xbf16>
    %cst_19 = arith.constant dense<0.000000e+00> : vector<8x128xf32>
    %46 = tpu.matmul %44, %45, %cst_19 {dimension_numbers = #tpu.dot_dimension_numbers<[1], [0], [0], [1], [0, 0, 1, 1], [], []>} : vector<8x896xbf16>, vector<896x128xbf16>, vector<8x128xf32> -> vector<8x128xf32>
    %c0_20 = arith.constant 0 : index
    %c0_21 = arith.constant 0 : index
    %47 = vector.load %arg4[%c0_20, %c0_21] : memref<1x128xf32, #tpu.memory_space<vmem>>, vector<1x128xf32>
    %48 = vector.broadcast %47 : vector<1x128xf32> to vector<8x128xf32>
    %49 = arith.addf %46, %48 : vector<8x128xf32>
    %cst_22 = arith.constant 0.000000e+00 : f32
    %50 = vector.broadcast %cst_22 : f32 to vector<8x128xf32>
    %51 = arith.maximumf %49, %50 : vector<8x128xf32>
    %52 = arith.truncf %51 : vector<8x128xf32> to vector<8x128xbf16>
    %c0_23 = arith.constant 0 : index
    %c0_24 = arith.constant 0 : index
    %53 = vector.load %arg5[%c0_23, %c0_24] : memref<128x128xbf16, #tpu.memory_space<vmem>>, vector<128x128xbf16>
    %cst_25 = arith.constant dense<0.000000e+00> : vector<8x128xf32>
    %54 = tpu.matmul %52, %53, %cst_25 {dimension_numbers = #tpu.dot_dimension_numbers<[1], [0], [0], [1], [0, 0, 1, 1], [], []>} : vector<8x128xbf16>, vector<128x128xbf16>, vector<8x128xf32> -> vector<8x128xf32>
    %c0_26 = arith.constant 0 : index
    %c0_27 = arith.constant 0 : index
    %55 = vector.load %arg6[%c0_26, %c0_27] : memref<8x128xf32, #tpu.memory_space<vmem>>, vector<8x128xf32>
    tpu.vector_store %arg6[%c0_26, %c0_27], %54 {strides = array<i32>} : memref<8x128xf32, #tpu.memory_space<vmem>>, vector<8x128xf32>,
    return
  }
  func.func @transform_0(%arg0: i32) -> (i32, i32) {
    %c0_i32 = arith.constant 0 : i32
    %c0_i32_0 = arith.constant 0 : i32
    %c0_i32_1 = arith.constant 0 : i32
    return %c0_i32, %c0_i32_0 : i32, i32
  }
  func.func @transform_1(%arg0: i32) -> (i32, i32, i32) {
    %c0_i32 = arith.constant 0 : i32
    %c0_i32_0 = arith.constant 0 : i32
    %c0_i32_1 = arith.constant 0 : i32
    %c0_i32_2 = arith.constant 0 : i32
    return %c0_i32, %c0_i32_0, %c0_i32_1 : i32, i32, i32
  }
  func.func @transform_2(%arg0: i32) -> (i32, i32) {
    %c0_i32 = arith.constant 0 : i32
    %c0_i32_0 = arith.constant 0 : i32
    %c0_i32_1 = arith.constant 0 : i32
    return %c0_i32, %c0_i32_0 : i32, i32
  }
  func.func @transform_3(%arg0: i32) -> (i32, i32) {
    %c0_i32 = arith.constant 0 : i32
    %c0_i32_0 = arith.constant 0 : i32
    %c0_i32_1 = arith.constant 0 : i32
    return %c0_i32, %c0_i32_0 : i32, i32
  }
  func.func @transform_4(%arg0: i32) -> (i32, i32) {
    %c0_i32 = arith.constant 0 : i32
    %c0_i32_0 = arith.constant 0 : i32
    %c0_i32_1 = arith.constant 0 : i32
    return %c0_i32, %c0_i32_0 : i32, i32
  }
  func.func @transform_5(%arg0: i32) -> (i32, i32) {
    %c0_i32 = arith.constant 0 : i32
    %c0_i32_0 = arith.constant 0 : i32
    %c0_i32_1 = arith.constant 0 : i32
    return %c0_i32, %c0_i32_0 : i32, i32
  }
}

</mosaic_0001>

<llo_original>
// kernel: inference_pipeline.1
$region0: #{inference_pipeline.1}
  #allocation0 [shape = 'u32[]', space=smem, size = 0x4, offset = 0x4, fixed_abs, tag = 'smem constant byte address 0x4 - core index']
  #allocation1 [shape = 'u32[144,128]{1,0:T(1,128)}', space=vmem, size = 0x12000, scoped, tag = 'internal scratch']
  %s0 = inlined_call_operand.vmem [shape: s32[9,640], index: 0, kind: input, shape index: {}]
  %s1 = inlined_call_operand.vmem [shape: bf16[3,8,256], index: 1, kind: input, shape index: {}]
  %s2 = inlined_call_operand.vmem [shape: bf16[896,128], index: 2, kind: input, shape index: {}]
  %s3 = inlined_call_operand.vmem [shape: f32[1,128], index: 3, kind: input, shape index: {}]
  %s4 = inlined_call_operand.vmem [shape: bf16[128,128], index: 4, kind: input, shape index: {}]
  %s5 = inlined_call_operand.hbm [shape: f32[8,128], index: 5, kind: output, shape index: {}]
  %s6 = sld [smem:[#allocation0]]
  $region30: #{inference_pipeline.1} parent=0
    _
  %s8 = ssub.s32 1, %s6
  %s9 = scalar_select 0, %s8, %s6
  $region1: #{inference_pipeline.1} parent=0
    #allocation2 [shape = 'u8[4096]{0}', space=vmem, size = 0x1000, scoped, tag = 'output window, operand 0, single buffered']
    #allocation3 [shape = 's32[1]{0}', space=sflag, size = 0x4, scoped, tag = 'scoped memory for inference_pipeline.1']
    %10 = vsyncpa [#allocation3], 0
    // Predicated region
    $region2: #{inference_pipeline.1} parent=1 // pred_check
      _
    $region3: #{inference_pipeline.1} parent=1 // pred_check_branch
      %12 = sbr.rel (0) target = $region5
    $region4: #{inference_pipeline.1} parent=1 // pred_region
      _
    $region5: #{inference_pipeline.1} parent=1 // pred_fallthru
      _
    // Predicated region
    $region6: #{inference_pipeline.1} parent=1 // pred_check
      _
    $region7: #{inference_pipeline.1} parent=1 // pred_check_branch
      %14 = sbr.rel (0) target = $region9
    $region8: #{inference_pipeline.1} parent=1 // pred_region
      _
    $region9: #{inference_pipeline.1} parent=1 // pred_fallthru
      _
    // Predicated region
    $region10: #{inference_pipeline.1} parent=1 // pred_check
      _
    $region11: #{inference_pipeline.1} parent=1 // pred_check_branch
      %16 = sbr.rel (0) target = $region13
    $region12: #{inference_pipeline.1} parent=1 // pred_region
      _
    $region13: #{inference_pipeline.1} parent=1 // pred_fallthru
      _
    // Predicated region
    $region14: #{inference_pipeline.1} parent=1 // pred_check
      _
    $region15: #{inference_pipeline.1} parent=1 // pred_check_branch
      %18 = sbr.rel (0) target = $region17
    $region16: #{inference_pipeline.1} parent=1 // pred_region
      _
    $region17: #{inference_pipeline.1} parent=1 // pred_fallthru
      _
    // Predicated region
    $region18: #{inference_pipeline.1} parent=1 // pred_check
      _
    $region19: #{inference_pipeline.1} parent=1 // pred_check_branch
      %20 = sbr.rel (0) target = $region21
    $region20: #{inference_pipeline.1} parent=1 // pred_region
      _
    $region21: #{inference_pipeline.1} parent=1 // pred_fallthru
      _
    %v22 = vld [vmem:[%s0] sm:$0xff]
    %v23 = vld [vmem:[%s0 + $0x8] sm:$0xff]
    %v24 = vld [vmem:[%s0 + $0x10] sm:$0xff]
    %v25 = vld [vmem:[%s0 + $0x18] sm:$0xff]
    %v26 = vld [vmem:[%s0 + $0x20] sm:$0xff]
    %v27 = vld [vmem:[%s0 + $0x28] sm:$0x1]
    %v28 = vld [vmem:[%s0 + $0x30] sm:$0x1]
    %v29 = vld [vmem:[%s0 + $0x38] sm:$0x1]
    %v30 = vld [vmem:[%s0 + $0x40] sm:$0x1]
    %v31 = vld [vmem:[%s0 + $0x48] sm:$0x1]
    %v32 = vcvt.s32.f32 %v22
    %v33 = vcvt.s32.f32 %v23
    %v34 = vcvt.s32.f32 %v24
    %v35 = vcvt.s32.f32 %v25
    %v36 = vcvt.s32.f32 %v26
    %v37 = vcvt.s32.f32 %v27
    %v38 = vcvt.s32.f32 %v28
    %v39 = vcvt.s32.f32 %v29
    %v40 = vcvt.s32.f32 %v30
    %v41 = vcvt.s32.f32 %v31
    %v42 = vmul.f32 %v32, 3.0517578e-05
    %v43 = vmul.f32 %v33, 3.0517578e-05
    %v44 = vmul.f32 %v34, 3.0517578e-05
    %v45 = vmul.f32 %v35, 3.0517578e-05
    %v46 = vmul.f32 %v36, 3.0517578e-05
    %v47 = vmul.f32 %v37, 3.0517578e-05
    %v48 = vmul.f32 %v38, 3.0517578e-05
    %v49 = vmul.f32 %v39, 3.0517578e-05
    %v50 = vmul.f32 %v40, 3.0517578e-05
    %v51 = vmul.f32 %v41, 3.0517578e-05
    %v52 = vadd.f32 %v42, %v43
    %v53 = vadd.f32 %v52, %v44
    %v54 = vadd.f32 %v53, %v45
    %v55 = vadd.f32 %v54, %v46
    %vm56 = vcmask 1040384
    %v57 = vsel %vm56, %v47, 0.0
    %v58 = vadd.f32 %v55, %v57
    %v59 = vsel %vm56, %v48, 0.0
    %v60 = vadd.f32 %v58, %v59
    %v61 = vsel %vm56, %v49, 0.0
    %v62 = vadd.f32 %v60, %v61
    %v63 = vsel %vm56, %v50, 0.0
    %v64 = vadd.f32 %v62, %v63
    %v65 = vsel %vm56, %v51, 0.0
    %v66 = vadd.f32 %v64, %v65
    %67 = vadd.xlane.f32.xlu0 %v66
    %v68 = vpop.xlane.xlu0 %67
    %v69 = vrot.slane %v68, 4
    %v70 = vadd.f32 %v68, %v69
    %v71 = vrot.slane %v70, 2
    %v72 = vadd.f32 %v70, %v71
    %v73 = vrot.slane %v72, 1
    %v74 = vadd.f32 %v72, %v73
    %s75 = vtos %v74
    %v76 = vmul.f32 %v42, %v42
    %v77 = vmul.f32 %v43, %v43
    %v78 = vmul.f32 %v44, %v44
    %v79 = vmul.f32 %v45, %v45
    %v80 = vmul.f32 %v46, %v46
    %v81 = vmul.f32 %v47, %v47
    %v82 = vmul.f32 %v48, %v48
    %v83 = vmul.f32 %v49, %v49
    %v84 = vmul.f32 %v50, %v50
    %v85 = vmul.f32 %v51, %v51
    %v86 = vadd.f32 %v76, %v77
    %v87 = vadd.f32 %v86, %v78
    %v88 = vadd.f32 %v87, %v79
    %v89 = vadd.f32 %v88, %v80
    %v90 = vsel %vm56, %v81, 0.0
    %v91 = vadd.f32 %v89, %v90
    %v92 = vsel %vm56, %v82, 0.0
    %v93 = vadd.f32 %v91, %v92
    %v94 = vsel %vm56, %v83, 0.0
    %v95 = vadd.f32 %v93, %v94
    %v96 = vsel %vm56, %v84, 0.0
    %v97 = vadd.f32 %v95, %v96
    %v98 = vsel %vm56, %v85, 0.0
    %v99 = vadd.f32 %v97, %v98
    %100 = vadd.xlane.f32.xlu0 %v99
    %v101 = vpop.xlane.xlu0 %100
    %v102 = vrot.slane %v101, 4
    %v103 = vadd.f32 %v101, %v102
    %v104 = vrot.slane %v103, 2
    %v105 = vadd.f32 %v103, %v104
    %v106 = vrot.slane %v105, 1
    %v107 = vadd.f32 %v105, %v106
    %s108 = vtos %v107
    %s109 = smul.f32 %s75, 0.00019230769
    %s110 = smul.f32 %s108, 0.00019230769
    %s111 = smul.f32 %s109, %s109
    %s112 = ssub.f32 %s110, %s111
    %s113 = sadd.f32 %s112, 1e-05
    %v114 = vstv %s113
    %v115 = vrsqrt.pop %v114
    %s116 = vtos %v115
    %v117 = vstv %s109
    %v118 = vsub.f32 %v42, %v117
    %v119 = vsub.f32 %v43, %v117
    %v120 = vsub.f32 %v44, %v117
    %v121 = vsub.f32 %v45, %v117
    %v122 = vsub.f32 %v46, %v117
    %v123 = vstv %s116
    %v124 = vmul.f32 %v118, %v123
    %v125 = vmul.f32 %v119, %v123
    %v126 = vmul.f32 %v120, %v123
    %v127 = vmul.f32 %v121, %v123
    %v128 = vmul.f32 %v122, %v123
    %v129 = vld [vmem:[%s1] sm:$0xff]
    %v130 = vunpack.c.l.bf16 %v129
    %v131 = vunpack.c.h.bf16 %v129
    %s132 = scalar_lea.vmem %s1, 8
    %v133 = vld [vmem:[%s132] sm:$0xff]
    %v134 = vunpack.c.l.bf16 %v133
    %v135 = vunpack.c.h.bf16 %v133
    %s136 = scalar_lea.vmem %s1, 16
    %v137 = vld [vmem:[%s136] sm:$0xff]
    %v138 = vunpack.c.l.bf16 %v137
    %v139 = vunpack.c.h.bf16 %v137
    %v140 = vmul.f32 %v130, 0.0071063577
    %v141 = vmul.f32 %v131, 0.0071063577
    %v142 = vmul.f32 %v134, 0.013951277
    %v143 = vmul.f32 %v135, 0.013951277
    %v144 = vadd.f32 %v140, %v142
    %v145 = vadd.f32 %v141, %v143
    %v146 = vmul.f32 %v138, 0.0027094474
    %v147 = vmul.f32 %v139, 0.0027094474
    %v148 = vadd.f32 %v144, %v146
    %v149 = vadd.f32 %v145, %v147
    %v150 = vsub.f32 %v148, 2.551515
    %v151 = vsub.f32 %v149, 2.551515
    %v152 = vpack.c.bf16 %v124, %v124
    %v153 = vpack.c.bf16 %v125, %v125
    %v154 = vpack.c.bf16 %v126, %v126
    %v155 = vpack.c.bf16 %v127, %v127
    %v156 = vpack.c.bf16 %v128, %v128
    %v157 = vpack.c.bf16 %v150, %v150
    %v158 = vpack.c.bf16 %v151, %v151
    %v159 = vld [vmem:[%s2] sm:$0xf]
    %v160 = vld [vmem:[%s2 + $0x4] sm:$0xf]
    %v161 = vld [vmem:[%s2 + $0x8] sm:$0xf]
    %v162 = vld [vmem:[%s2 + $0xc] sm:$0xf]
    %v163 = vld [vmem:[%s2 + $0x10] sm:$0xf]
    %v164 = vld [vmem:[%s2 + $0x14] sm:$0xf]
    %v165 = vld [vmem:[%s2 + $0x18] sm:$0xf]
    %v166 = vld [vmem:[%s2 + $0x1c] sm:$0xf]
    %v167 = vld [vmem:[%s2 + $0x20] sm:$0xf]
    %v168 = vld [vmem:[%s2 + $0x24] sm:$0xf]
    %v169 = vld [vmem:[%s2 + $0x28] sm:$0xf]
    %v170 = vld [vmem:[%s2 + $0x2c] sm:$0xf]
    %v171 = vld [vmem:[%s2 + $0x30] sm:$0xf]
    %v172 = vld [vmem:[%s2 + $0x34] sm:$0xf]
    %v173 = vld [vmem:[%s2 + $0x38] sm:$0xf]
    %v174 = vld [vmem:[%s2 + $0x3c] sm:$0xf]
    %v175 = vld [vmem:[%s2 + $0x40] sm:$0xf]
    %v176 = vld [vmem:[%s2 + $0x44] sm:$0xf]
    %v177 = vld [vmem:[%s2 + $0x48] sm:$0xf]
    %v178 = vld [vmem:[%s2 + $0x4c] sm:$0xf]
    %v179 = vld [vmem:[%s2 + $0x50] sm:$0xf]
    %v180 = vld [vmem:[%s2 + $0x54] sm:$0xf]
    %v181 = vld [vmem:[%s2 + $0x58] sm:$0xf]
    %v182 = vld [vmem:[%s2 + $0x5c] sm:$0xf]
    %v183 = vld [vmem:[%s2 + $0x60] sm:$0xf]
    %v184 = vld [vmem:[%s2 + $0x64] sm:$0xf]
    %v185 = vld [vmem:[%s2 + $0x68] sm:$0xf]
    %v186 = vld [vmem:[%s2 + $0x6c] sm:$0xf]
    %v187 = vld [vmem:[%s2 + $0x70] sm:$0xf]
    %v188 = vld [vmem:[%s2 + $0x74] sm:$0xf]
    %v189 = vld [vmem:[%s2 + $0x78] sm:$0xf]
    %v190 = vld [vmem:[%s2 + $0x7c] sm:$0xf]
    %v191 = vld [vmem:[%s2 + $0x80] sm:$0xf]
    %v192 = vld [vmem:[%s2 + $0x84] sm:$0xf]
    %v193 = vld [vmem:[%s2 + $0x88] sm:$0xf]
    %v194 = vld [vmem:[%s2 + $0x8c] sm:$0xf]
    %v195 = vld [vmem:[%s2 + $0x90] sm:$0xf]
    %v196 = vld [vmem:[%s2 + $0x94] sm:$0xf]
    %v197 = vld [vmem:[%s2 + $0x98] sm:$0xf]
    %v198 = vld [vmem:[%s2 + $0x9c] sm:$0xf]
    %v199 = vld [vmem:[%s2 + $0xa0] sm:$0xf]
    %v200 = vld [vmem:[%s2 + $0xa4] sm:$0xf]
    %v201 = vld [vmem:[%s2 + $0xa8] sm:$0xf]
    %v202 = vld [vmem:[%s2 + $0xac] sm:$0xf]
    %v203 = vld [vmem:[%s2 + $0xb0] sm:$0xf]
    %v204 = vld [vmem:[%s2 + $0xb4] sm:$0xf]
    %v205 = vld [vmem:[%s2 + $0xb8] sm:$0xf]
    %v206 = vld [vmem:[%s2 + $0xbc] sm:$0xf]
    %v207 = vld [vmem:[%s2 + $0xc0] sm:$0xf]
    %v208 = vld [vmem:[%s2 + $0xc4] sm:$0xf]
    %v209 = vld [vmem:[%s2 + $0xc8] sm:$0xf]
    %v210 = vld [vmem:[%s2 + $0xcc] sm:$0xf]
    %v211 = vld [vmem:[%s2 + $0xd0] sm:$0xf]
    %v212 = vld [vmem:[%s2 + $0xd4] sm:$0xf]
    %v213 = vld [vmem:[%s2 + $0xd8] sm:$0xf]
    %v214 = vld [vmem:[%s2 + $0xdc] sm:$0xf]
    %v215 = vld [vmem:[%s2 + $0xe0] sm:$0xf]
    %v216 = vld [vmem:[%s2 + $0xe4] sm:$0xf]
    %v217 = vld [vmem:[%s2 + $0xe8] sm:$0xf]
    %v218 = vld [vmem:[%s2 + $0xec] sm:$0xf]
    %v219 = vld [vmem:[%s2 + $0xf0] sm:$0xf]
    %v220 = vld [vmem:[%s2 + $0xf4] sm:$0xf]
    %v221 = vld [vmem:[%s2 + $0xf8] sm:$0xf]
    %v222 = vld [vmem:[%s2 + $0xfc] sm:$0xf]
    %v223 = vld [vmem:[%s2 + $0x100] sm:$0xf]
    %v224 = vld [vmem:[%s2 + $0x104] sm:$0xf]
    %v225 = vld [vmem:[%s2 + $0x108] sm:$0xf]
    %v226 = vld [vmem:[%s2 + $0x10c] sm:$0xf]
    %v227 = vld [vmem:[%s2 + $0x110] sm:$0xf]
    %v228 = vld [vmem:[%s2 + $0x114] sm:$0xf]
    %v229 = vld [vmem:[%s2 + $0x118] sm:$0xf]
    %v230 = vld [vmem:[%s2 + $0x11c] sm:$0xf]
    %v231 = vld [vmem:[%s2 + $0x120] sm:$0xf]
    %v232 = vld [vmem:[%s2 + $0x124] sm:$0xf]
    %v233 = vld [vmem:[%s2 + $0x128] sm:$0xf]
    %v234 = vld [vmem:[%s2 + $0x12c] sm:$0xf]
    %v235 = vld [vmem:[%s2 + $0x130] sm:$0xf]
    %v236 = vld [vmem:[%s2 + $0x134] sm:$0xf]
    %v237 = vld [vmem:[%s2 + $0x138] sm:$0xf]
    %v238 = vld [vmem:[%s2 + $0x13c] sm:$0xf]
    %v239 = vld [vmem:[%s2 + $0x140] sm:$0xf]
    %v240 = vld [vmem:[%s2 + $0x144] sm:$0xf]
    %v241 = vld [vmem:[%s2 + $0x148] sm:$0xf]
    %v242 = vld [vmem:[%s2 + $0x14c] sm:$0xf]
    %v243 = vld [vmem:[%s2 + $0x150] sm:$0xf]
    %v244 = vld [vmem:[%s2 + $0x154] sm:$0xf]
    %v245 = vld [vmem:[%s2 + $0x158] sm:$0xf]
    %v246 = vld [vmem:[%s2 + $0x15c] sm:$0xf]
    %v247 = vld [vmem:[%s2 + $0x160] sm:$0xf]
    %v248 = vld [vmem:[%s2 + $0x164] sm:$0xf]
    %v249 = vld [vmem:[%s2 + $0x168] sm:$0xf]
    %v250 = vld [vmem:[%s2 + $0x16c] sm:$0xf]
    %v251 = vld [vmem:[%s2 + $0x170] sm:$0xf]
    %v252 = vld [vmem:[%s2 + $0x174] sm:$0xf]
    %v253 = vld [vmem:[%s2 + $0x178] sm:$0xf]
    %v254 = vld [vmem:[%s2 + $0x17c] sm:$0xf]
    %v255 = vld [vmem:[%s2 + $0x180] sm:$0xf]
    %v256 = vld [vmem:[%s2 + $0x184] sm:$0xf]
    %v257 = vld [vmem:[%s2 + $0x188] sm:$0xf]
    %v258 = vld [vmem:[%s2 + $0x18c] sm:$0xf]
    %v259 = vld [vmem:[%s2 + $0x190] sm:$0xf]
    %v260 = vld [vmem:[%s2 + $0x194] sm:$0xf]
    %v261 = vld [vmem:[%s2 + $0x198] sm:$0xf]
    %v262 = vld [vmem:[%s2 + $0x19c] sm:$0xf]
    %v263 = vld [vmem:[%s2 + $0x1a0] sm:$0xf]
    %v264 = vld [vmem:[%s2 + $0x1a4] sm:$0xf]
    %v265 = vld [vmem:[%s2 + $0x1a8] sm:$0xf]
    %v266 = vld [vmem:[%s2 + $0x1ac] sm:$0xf]
    %v267 = vld [vmem:[%s2 + $0x1b0] sm:$0xf]
    %v268 = vld [vmem:[%s2 + $0x1b4] sm:$0xf]
    %v269 = vld [vmem:[%s2 + $0x1b8] sm:$0xf]
    %v270 = vld [vmem:[%s2 + $0x1bc] sm:$0xf]
    %v271 = vld [vmem:[%s3] sm:$0x1]
    %v273 = vlaneseq
    %v274 = vshrl.u32 %v273, 7
    %v275 = vsub.s32 0, %v274
    %v276 = vrot.slane %v271, %v275
    %v390 = vunpack.c.l.b16 %v159
    %v391 = vunpack.c.l.b16 %v160
    %v392 = vunpack.c.l.b16 %v161
    %v393 = vunpack.c.l.b16 %v162
    %v394 = vunpack.c.l.b16 %v163
    %v395 = vunpack.c.l.b16 %v164
    %v396 = vunpack.c.l.b16 %v165
    %v397 = vunpack.c.l.b16 %v166
    %v398 = vunpack.c.l.b16 %v167
    %v399 = vunpack.c.l.b16 %v168
    %v400 = vunpack.c.l.b16 %v169
    %v401 = vunpack.c.l.b16 %v170
    %v402 = vunpack.c.l.b16 %v171
    %v403 = vunpack.c.l.b16 %v172
    %v404 = vunpack.c.l.b16 %v173
    %v405 = vunpack.c.l.b16 %v174
    %v406 = vunpack.c.l.b16 %v175
    %v407 = vunpack.c.l.b16 %v176
    %v408 = vunpack.c.l.b16 %v177
    %v409 = vunpack.c.l.b16 %v178
    %v410 = vunpack.c.l.b16 %v179
    %v411 = vunpack.c.l.b16 %v180
    %v412 = vunpack.c.l.b16 %v181
    %v413 = vunpack.c.l.b16 %v182
    %v414 = vunpack.c.l.b16 %v183
    %v415 = vunpack.c.l.b16 %v184
    %v416 = vunpack.c.l.b16 %v185
    %v417 = vunpack.c.l.b16 %v186
    %v418 = vunpack.c.l.b16 %v187
    %v419 = vunpack.c.l.b16 %v188
    %v420 = vunpack.c.l.b16 %v189
    %v421 = vunpack.c.l.b16 %v190
    %v422 = vunpack.c.l.b16 %v191
    %v423 = vunpack.c.l.b16 %v192
    %v424 = vunpack.c.l.b16 %v193
    %v425 = vunpack.c.l.b16 %v194
    %v426 = vunpack.c.l.b16 %v195
    %v427 = vunpack.c.l.b16 %v196
    %v428 = vunpack.c.l.b16 %v197
    %v429 = vunpack.c.l.b16 %v198
    %v430 = vunpack.c.l.b16 %v199
    %v431 = vunpack.c.l.b16 %v200
    %v432 = vunpack.c.l.b16 %v201
    %v433 = vunpack.c.l.b16 %v202
    %v434 = vunpack.c.l.b16 %v203
    %v435 = vunpack.c.l.b16 %v204
    %v436 = vunpack.c.l.b16 %v205
    %v437 = vunpack.c.l.b16 %v206
    %v438 = vunpack.c.l.b16 %v207
    %v439 = vunpack.c.l.b16 %v208
    %v440 = vunpack.c.l.b16 %v209
    %v441 = vunpack.c.l.b16 %v210
    %v442 = vunpack.c.l.b16 %v211
    %v443 = vunpack.c.l.b16 %v212
    %v444 = vunpack.c.l.b16 %v213
    %v445 = vunpack.c.l.b16 %v214
    %v446 = vunpack.c.l.b16 %v215
    %v447 = vunpack.c.l.b16 %v216
    %v448 = vunpack.c.l.b16 %v217
    %v449 = vunpack.c.l.b16 %v218
    %v450 = vunpack.c.l.b16 %v219
    %v451 = vunpack.c.l.b16 %v220
    %v452 = vunpack.c.l.b16 %v221
    %v453 = vunpack.c.l.b16 %v222
    %v454 = vunpack.c.l.b16 %v223
    %v455 = vunpack.c.l.b16 %v224
    %v456 = vunpack.c.l.b16 %v225
    %v457 = vunpack.c.l.b16 %v226
    %v458 = vunpack.c.l.b16 %v227
    %v459 = vunpack.c.l.b16 %v228
    %v460 = vunpack.c.l.b16 %v229
    %v461 = vunpack.c.l.b16 %v230
    %v462 = vunpack.c.l.b16 %v231
    %v463 = vunpack.c.l.b16 %v232
    %v464 = vunpack.c.l.b16 %v233
    %v465 = vunpack.c.l.b16 %v234
    %v466 = vunpack.c.l.b16 %v235
    %v467 = vunpack.c.l.b16 %v236
    %v468 = vunpack.c.l.b16 %v237
    %v469 = vunpack.c.l.b16 %v238
    %v470 = vunpack.c.l.b16 %v239
    %v471 = vunpack.c.l.b16 %v240
    %v472 = vunpack.c.l.b16 %v241
    %v473 = vunpack.c.l.b16 %v242
    %v474 = vunpack.c.l.b16 %v243
    %v475 = vunpack.c.l.b16 %v244
    %v476 = vunpack.c.l.b16 %v245
    %v477 = vunpack.c.l.b16 %v246
    %v478 = vunpack.c.l.b16 %v247
    %v479 = vunpack.c.l.b16 %v248
    %v480 = vunpack.c.l.b16 %v249
    %v481 = vunpack.c.l.b16 %v250
    %v482 = vunpack.c.l.b16 %v251
    %v483 = vunpack.c.l.b16 %v252
    %v484 = vunpack.c.l.b16 %v253
    %v485 = vunpack.c.l.b16 %v254
    %v486 = vunpack.c.l.b16 %v255
    %v487 = vunpack.c.l.b16 %v256
    %v488 = vunpack.c.l.b16 %v257
    %v489 = vunpack.c.l.b16 %v258
    %v490 = vunpack.c.l.b16 %v259
    %v491 = vunpack.c.l.b16 %v260
    %v492 = vunpack.c.l.b16 %v261
    %v493 = vunpack.c.l.b16 %v262
    %v494 = vunpack.c.l.b16 %v263
    %v495 = vunpack.c.l.b16 %v264
    %v496 = vunpack.c.l.b16 %v265
    %v497 = vunpack.c.l.b16 %v266
    %v498 = vunpack.c.l.b16 %v267
    %v499 = vunpack.c.l.b16 %v268
    %v500 = vunpack.c.l.b16 %v269
    %v501 = vunpack.c.l.b16 %v270
    %v502 = vpack.c.b16 %v391, %v390
    %v503 = vpack.c.b16 %v393, %v392
    %v504 = vpack.c.b16 %v395, %v394
    %v505 = vpack.c.b16 %v397, %v396
    %v506 = vpack.c.b16 %v399, %v398
    %v507 = vpack.c.b16 %v401, %v400
    %v508 = vpack.c.b16 %v403, %v402
    %v509 = vpack.c.b16 %v405, %v404
    %v510 = vpack.c.b16 %v407, %v406
    %v511 = vpack.c.b16 %v409, %v408
    %v512 = vpack.c.b16 %v411, %v410
    %v513 = vpack.c.b16 %v413, %v412
    %v514 = vpack.c.b16 %v415, %v414
    %v515 = vpack.c.b16 %v417, %v416
    %v516 = vpack.c.b16 %v419, %v418
    %v517 = vpack.c.b16 %v421, %v420
    %v518 = vpack.c.b16 %v423, %v422
    %v519 = vpack.c.b16 %v425, %v424
    %v520 = vpack.c.b16 %v427, %v426
    %v521 = vpack.c.b16 %v429, %v428
    %v522 = vpack.c.b16 %v431, %v430
    %v523 = vpack.c.b16 %v433, %v432
    %v524 = vpack.c.b16 %v435, %v434
    %v525 = vpack.c.b16 %v437, %v436
    %v526 = vpack.c.b16 %v439, %v438
    %v527 = vpack.c.b16 %v441, %v440
    %v528 = vpack.c.b16 %v443, %v442
    %v529 = vpack.c.b16 %v445, %v444
    %v530 = vpack.c.b16 %v447, %v446
    %v531 = vpack.c.b16 %v449, %v448
    %v532 = vpack.c.b16 %v451, %v450
    %v533 = vpack.c.b16 %v453, %v452
    %v534 = vpack.c.b16 %v455, %v454
    %v535 = vpack.c.b16 %v457, %v456
    %v536 = vpack.c.b16 %v459, %v458
    %v537 = vpack.c.b16 %v461, %v460
    %v538 = vpack.c.b16 %v463, %v462
    %v539 = vpack.c.b16 %v465, %v464
    %v540 = vpack.c.b16 %v467, %v466
    %v541 = vpack.c.b16 %v469, %v468
    %v542 = vpack.c.b16 %v471, %v470
    %v543 = vpack.c.b16 %v473, %v472
    %v544 = vpack.c.b16 %v475, %v474
    %v545 = vpack.c.b16 %v477, %v476
    %v546 = vpack.c.b16 %v479, %v478
    %v547 = vpack.c.b16 %v481, %v480
    %v548 = vpack.c.b16 %v483, %v482
    %v549 = vpack.c.b16 %v485, %v484
    %v550 = vpack.c.b16 %v487, %v486
    %v551 = vpack.c.b16 %v489, %v488
    %v552 = vpack.c.b16 %v491, %v490
    %v553 = vpack.c.b16 %v493, %v492
    %v554 = vpack.c.b16 %v495, %v494
    %v555 = vpack.c.b16 %v497, %v496
    %v556 = vpack.c.b16 %v499, %v498
    %v557 = vpack.c.b16 %v501, %v500
    %614 = vmatprep.subr.bf16.mxu0 0
    %615 = vmatpush1.bf16.msra.mxu0 %v502
    %616 = vmatprep.subr.bf16.mxu0 0
    %617 = vmatpush1.bf16.msra.mxu0 %v503
    %618 = vmatprep.subr.bf16.mxu0 0
    %619 = vmatpush1.bf16.msra.mxu0 %v504
    %620 = vmatprep.subr.bf16.mxu0 0
    %621 = vmatpush1.bf16.msra.mxu0 %v505
    %622 = vmatprep.subr.bf16.mxu0 0
    %623 = vmatpush1.bf16.msra.mxu0 %v506
    %624 = vmatprep.subr.bf16.mxu0 0
    %625 = vmatpush1.bf16.msra.mxu0 %v507
    %626 = vmatprep.subr.bf16.mxu0 0
    %627 = vmatpush1.bf16.msra.mxu0 %v508
    %628 = vmatprep.subr.bf16.mxu0 0
    %629 = vmatpush1.bf16.msra.mxu0 %v509
    %630 = vmatprep.subr.bf16.mxu0 0
    %631 = vmatpush1.bf16.msra.mxu0 %v510
    %632 = vmatprep.subr.bf16.mxu0 0
    %633 = vmatpush1.bf16.msra.mxu0 %v511
    %634 = vmatprep.subr.bf16.mxu0 0
    %635 = vmatpush1.bf16.msra.mxu0 %v512
    %636 = vmatprep.subr.bf16.mxu0 0
    %637 = vmatpush1.bf16.msra.mxu0 %v513
    %638 = vmatprep.subr.bf16.mxu0 0
    %639 = vmatpush1.bf16.msra.mxu0 %v514
    %640 = vmatprep.subr.bf16.mxu0 0
    %641 = vmatpush1.bf16.msra.mxu0 %v515
    %642 = vmatprep.subr.bf16.mxu0 0
    %643 = vmatpush1.bf16.msra.mxu0 %v516
    %644 = vmatprep.subr.bf16.mxu0 0
    %645 = vmatpush1.bf16.msra.mxu0 %v517
    %646 = vmatprep.mubr.bf16.mxu0 %v153
    %647 = vmatmul.mubr.bf16.gmra.mrb[0].mxu0 %v152
    %v648 = vpop.f32.mrb[0].mxu0
    %v649 = vadd.f32 %v276, %v648
    %v650 = vpop.f32.mrb[0].mxu0
    %v651 = vpop.f32.mrb[0].mxu0
    %v652 = vpop.f32.mrb[0].mxu0
    %653 = vdwg.mxu0
    %654 = vmatprep.subr.bf16.mxu0 0
    %655 = vmatpush1.bf16.msra.mxu0 %v518
    %656 = vmatprep.subr.bf16.mxu0 0
    %657 = vmatpush1.bf16.msra.mxu0 %v519
    %658 = vmatprep.subr.bf16.mxu0 0
    %659 = vmatpush1.bf16.msra.mxu0 %v520
    %660 = vmatprep.subr.bf16.mxu0 0
    %661 = vmatpush1.bf16.msra.mxu0 %v521
    %662 = vmatprep.subr.bf16.mxu0 0
    %663 = vmatpush1.bf16.msra.mxu0 %v522
    %664 = vmatprep.subr.bf16.mxu0 0
    %665 = vmatpush1.bf16.msra.mxu0 %v523
    %666 = vmatprep.subr.bf16.mxu0 0
    %667 = vmatpush1.bf16.msra.mxu0 %v524
    %668 = vmatprep.subr.bf16.mxu0 0
    %669 = vmatpush1.bf16.msra.mxu0 %v525
    %670 = vmatprep.subr.bf16.mxu0 0
    %671 = vmatpush1.bf16.msra.mxu0 %v526
    %672 = vmatprep.subr.bf16.mxu0 0
    %673 = vmatpush1.bf16.msra.mxu0 %v527
    %674 = vmatprep.subr.bf16.mxu0 0
    %675 = vmatpush1.bf16.msra.mxu0 %v528
    %676 = vmatprep.subr.bf16.mxu0 0
    %677 = vmatpush1.bf16.msra.mxu0 %v529
    %678 = vmatprep.subr.bf16.mxu0 0
    %679 = vmatpush1.bf16.msra.mxu0 %v530
    %680 = vmatprep.subr.bf16.mxu0 0
    %681 = vmatpush1.bf16.msra.mxu0 %v531
    %682 = vmatprep.subr.bf16.mxu0 0
    %683 = vmatpush1.bf16.msra.mxu0 %v532
    %684 = vmatprep.subr.bf16.mxu0 0
    %685 = vmatpush1.bf16.msra.mxu0 %v533
    %686 = vmatprep.mubr.bf16.mxu0 %v155
    %687 = vmatmul.mubr.bf16.gmra.mrb[0].mxu0 %v154
    %v688 = vpop.f32.mrb[0].mxu0
    %v689 = vadd.f32 %v649, %v688
    %v690 = vpop.f32.mrb[0].mxu0
    %v691 = vpop.f32.mrb[0].mxu0
    %v692 = vpop.f32.mrb[0].mxu0
    %693 = vdwg.mxu0
    %694 = vmatprep.subr.bf16.mxu0 0
    %695 = vmatpush1.bf16.msra.mxu0 %v534
    %696 = vmatprep.subr.bf16.mxu0 0
    %697 = vmatpush1.bf16.msra.mxu0 %v535
    %698 = vmatprep.subr.bf16.mxu0 0
    %699 = vmatpush1.bf16.msra.mxu0 %v536
    %700 = vmatprep.subr.bf16.mxu0 0
    %701 = vmatpush1.bf16.msra.mxu0 %v537
    %702 = vmatprep.subr.bf16.mxu0 0
    %703 = vmatpush1.bf16.msra.mxu0 %v538
    %704 = vmatprep.subr.bf16.mxu0 0
    %705 = vmatpush1.bf16.msra.mxu0 %v539
    %706 = vmatprep.subr.bf16.mxu0 0
    %707 = vmatpush1.bf16.msra.mxu0 %v540
    %708 = vmatprep.subr.bf16.mxu0 0
    %709 = vmatpush1.bf16.msra.mxu0 %v541
    %710 = vmatprep.subr.bf16.mxu0 0
    %711 = vmatpush1.bf16.msra.mxu0 %v542
    %712 = vmatprep.subr.bf16.mxu0 0
    %713 = vmatpush1.bf16.msra.mxu0 %v543
    %714 = vmatprep.subr.bf16.mxu0 0
    %715 = vmatpush1.bf16.msra.mxu0 %v544
    %716 = vmatprep.subr.bf16.mxu0 0
    %717 = vmatpush1.bf16.msra.mxu0 %v545
    %718 = vmatprep.subr.bf16.mxu0 0
    %719 = vmatpush1.bf16.msra.mxu0 %v546
    %720 = vmatprep.subr.bf16.mxu0 0
    %721 = vmatpush1.bf16.msra.mxu0 %v547
    %722 = vmatprep.subr.bf16.mxu0 0
    %723 = vmatpush1.bf16.msra.mxu0 %v548
    %724 = vmatprep.subr.bf16.mxu0 0
    %725 = vmatpush1.bf16.msra.mxu0 %v549
    %726 = vmatprep.mubr.bf16.mxu0 %v157
    %727 = vmatmul.mubr.bf16.gmra.mrb[0].mxu0 %v156
    %v728 = vpop.f32.mrb[0].mxu0
    %v729 = vadd.f32 %v689, %v728
    %v730 = vpop.f32.mrb[0].mxu0
    %v731 = vpop.f32.mrb[0].mxu0
    %v732 = vpop.f32.mrb[0].mxu0
    %733 = vdwg.mxu0
    %734 = vmatprep.subr.bf16.mxu0 0
    %735 = vmatpush1.bf16.msra.mxu0 %v550
    %736 = vmatprep.subr.bf16.mxu0 0
    %737 = vmatpush1.bf16.msra.mxu0 %v551
    %738 = vmatprep.subr.bf16.mxu0 0
    %739 = vmatpush1.bf16.msra.mxu0 %v552
    %740 = vmatprep.subr.bf16.mxu0 0
    %741 = vmatpush1.bf16.msra.mxu0 %v553
    %742 = vmatprep.subr.bf16.mxu0 0
    %743 = vmatpush1.bf16.msra.mxu0 %v554
    %744 = vmatprep.subr.bf16.mxu0 0
    %745 = vmatpush1.bf16.msra.mxu0 %v555
    %746 = vmatprep.subr.bf16.mxu0 0
    %747 = vmatpush1.bf16.msra.mxu0 %v556
    %748 = vmatprep.subr.bf16.mxu0 0
    %749 = vmatpush1.bf16.msra.mxu0 %v557
    %750 = vmatprep.subr.bf16.mxu0 0
    %751 = vmatpush1.bf16.msra.mxu0 0
    %752 = vmatprep.subr.bf16.mxu0 0
    %753 = vmatpush1.bf16.msra.mxu0 0
    %754 = vmatprep.subr.bf16.mxu0 0
    %755 = vmatpush1.bf16.msra.mxu0 0
    %756 = vmatprep.subr.bf16.mxu0 0
    %757 = vmatpush1.bf16.msra.mxu0 0
    %758 = vmatprep.subr.bf16.mxu0 0
    %759 = vmatpush1.bf16.msra.mxu0 0
    %760 = vmatprep.subr.bf16.mxu0 0
    %761 = vmatpush1.bf16.msra.mxu0 0
    %762 = vmatprep.subr.bf16.mxu0 0
    %763 = vmatpush1.bf16.msra.mxu0 0
    %764 = vmatprep.subr.bf16.mxu0 0
    %765 = vmatpush1.bf16.msra.mxu0 0
    %766 = vmatprep.mubr.bf16.mxu0 0
    %767 = vmatmul.mubr.bf16.gmra.mrb[0].mxu0 %v158
    %v768 = vpop.f32.mrb[0].mxu0
    %v769 = vadd.f32 %v729, %v768
    %v770 = vpop.f32.mrb[0].mxu0
    %v771 = vpop.f32.mrb[0].mxu0
    %v772 = vpop.f32.mrb[0].mxu0
    %773 = vdwg.mxu0
    %v774 = vmax.f32 %v769, 0.0
    %v775 = vpack.c.bf16 %v774, %v774
    %v776 = vld [vmem:[%s4] sm:$0xf]
    %v777 = vld [vmem:[%s4 + $0x4] sm:$0xf]
    %v778 = vld [vmem:[%s4 + $0x8] sm:$0xf]
    %v779 = vld [vmem:[%s4 + $0xc] sm:$0xf]
    %v780 = vld [vmem:[%s4 + $0x10] sm:$0xf]
    %v781 = vld [vmem:[%s4 + $0x14] sm:$0xf]
    %v782 = vld [vmem:[%s4 + $0x18] sm:$0xf]
    %v783 = vld [vmem:[%s4 + $0x1c] sm:$0xf]
    %v784 = vld [vmem:[%s4 + $0x20] sm:$0xf]
    %v785 = vld [vmem:[%s4 + $0x24] sm:$0xf]
    %v786 = vld [vmem:[%s4 + $0x28] sm:$0xf]
    %v787 = vld [vmem:[%s4 + $0x2c] sm:$0xf]
    %v788 = vld [vmem:[%s4 + $0x30] sm:$0xf]
    %v789 = vld [vmem:[%s4 + $0x34] sm:$0xf]
    %v790 = vld [vmem:[%s4 + $0x38] sm:$0xf]
    %v791 = vld [vmem:[%s4 + $0x3c] sm:$0xf]
    %v808 = vunpack.c.l.b16 %v776
    %v809 = vunpack.c.l.b16 %v777
    %v810 = vunpack.c.l.b16 %v778
    %v811 = vunpack.c.l.b16 %v779
    %v812 = vunpack.c.l.b16 %v780
    %v813 = vunpack.c.l.b16 %v781
    %v814 = vunpack.c.l.b16 %v782
    %v815 = vunpack.c.l.b16 %v783
    %v816 = vunpack.c.l.b16 %v784
    %v817 = vunpack.c.l.b16 %v785
    %v818 = vunpack.c.l.b16 %v786
    %v819 = vunpack.c.l.b16 %v787
    %v820 = vunpack.c.l.b16 %v788
    %v821 = vunpack.c.l.b16 %v789
    %v822 = vunpack.c.l.b16 %v790
    %v823 = vunpack.c.l.b16 %v791
    %v824 = vpack.c.b16 %v809, %v808
    %v825 = vpack.c.b16 %v811, %v810
    %v826 = vpack.c.b16 %v813, %v812
    %v827 = vpack.c.b16 %v815, %v814
    %v828 = vpack.c.b16 %v817, %v816
    %v829 = vpack.c.b16 %v819, %v818
    %v830 = vpack.c.b16 %v821, %v820
    %v831 = vpack.c.b16 %v823, %v822
    %840 = vmatprep.subr.bf16.mxu0 0
    %841 = vmatpush1.bf16.msra.mxu0 %v824
    %842 = vmatprep.subr.bf16.mxu0 0
    %843 = vmatpush1.bf16.msra.mxu0 %v825
    %844 = vmatprep.subr.bf16.mxu0 0
    %845 = vmatpush1.bf16.msra.mxu0 %v826
    %846 = vmatprep.subr.bf16.mxu0 0
    %847 = vmatpush1.bf16.msra.mxu0 %v827
    %848 = vmatprep.subr.bf16.mxu0 0
    %849 = vmatpush1.bf16.msra.mxu0 %v828
    %850 = vmatprep.subr.bf16.mxu0 0
    %851 = vmatpush1.bf16.msra.mxu0 %v829
    %852 = vmatprep.subr.bf16.mxu0 0
    %853 = vmatpush1.bf16.msra.mxu0 %v830
    %854 = vmatprep.subr.bf16.mxu0 0
    %855 = vmatpush1.bf16.msra.mxu0 %v831
    %856 = vmatprep.subr.bf16.mxu0 0
    %857 = vmatpush1.bf16.msra.mxu0 0
    %858 = vmatprep.subr.bf16.mxu0 0
    %859 = vmatpush1.bf16.msra.mxu0 0
    %860 = vmatprep.subr.bf16.mxu0 0
    %861 = vmatpush1.bf16.msra.mxu0 0
    %862 = vmatprep.subr.bf16.mxu0 0
    %863 = vmatpush1.bf16.msra.mxu0 0
    %864 = vmatprep.subr.bf16.mxu0 0
    %865 = vmatpush1.bf16.msra.mxu0 0
    %866 = vmatprep.subr.bf16.mxu0 0
    %867 = vmatpush1.bf16.msra.mxu0 0
    %868 = vmatprep.subr.bf16.mxu0 0
    %869 = vmatpush1.bf16.msra.mxu0 0
    %870 = vmatprep.subr.bf16.mxu0 0
    %871 = vmatpush1.bf16.msra.mxu0 0
    %872 = vmatprep.mubr.bf16.mxu0 0
    %873 = vmatmul.mubr.bf16.gmra.mrb[0].mxu0 %v775
    %v874 = vpop.f32.mrb[0].mxu0
    %v875 = vadd.f32 0.0, %v874
    %v876 = vpop.f32.mrb[0].mxu0
    %v877 = vpop.f32.mrb[0].mxu0
    %v878 = vpop.f32.mrb[0].mxu0
    %879 = vdwg.mxu0
    %880 = vst [vmem:[#allocation2] sm:$0xff] %v875
    // Predicated region
    $region22: #{inference_pipeline.1} parent=1 // pred_check
      _
    $region23: #{inference_pipeline.1} parent=1 // pred_check_branch
      %882 = sbr.rel (0) target = $region25
    $region24: #{inference_pipeline.1} parent=1 // pred_region
      %s884 = ssub.s32 128, 128
      %885 = vsyncadd [#allocation3], %s884
      %s887 = sshll.u32 [#allocation2], 4
      %s888 = int_to_ptr.vmem [resolvable:$true] %s887
      %890 = dma.vmem_to_hbm [thread:$0]  %s888, 128, %s5, [#allocation3]
    $region25: #{inference_pipeline.1} parent=1 // pred_fallthru
      _
    // Predicated region
    $region26: #{inference_pipeline.1} parent=1 // pred_check
      _
    $region27: #{inference_pipeline.1} parent=1 // pred_check_branch
      %892 = sbr.rel (0) target = $region29
    $region28: #{inference_pipeline.1} parent=1 // pred_region
      %893 = dma.done [#allocation3], 128
    $region29: #{inference_pipeline.1} parent=1 // pred_fallthru
      _
    %894 = vsyncpa [#allocation3], 1

</llo_original>
